<compile_context>
chip_gen: v6e
topology: v6e:2x2x1
jax: 0.10.0
libtpu: 0.0.40
codegen_flags: <defaults>
</compile_context>

<pallas_src>
import jax
import jax.numpy as jnp
from jax.experimental import pallas as pl
from jax.experimental.pallas import tpu as pltpu


_N_INFLIGHT = 16  # concurrent row DMAs per grid step (tunable)


def _round_up(x: int, m: int) -> int:
    return ((x + m - 1) // m) * m


def _embed_gather_kernel(ids_ref, table_ref, out_ref, rows_vmem, sems):
    # ids_ref   : SMEM (n_pad,) int32      token ids (scalar-prefetched)
    # table_ref : HBM  (vocab, d_model)    embedding table (memory_space=ANY)
    # out_ref   : VMEM (tb, d_model)       output tile (auto-pipelined)
    # rows_vmem : VMEM (tb, d_model)       DMA landing buffer
    # sems      : DMA semaphores (_N_INFLIGHT,)
    tb = out_ref.shape[0]
    k = min(_N_INFLIGHT, tb)               # in-flight window (static)
    base = pl.program_id(0) * tb

    def row_copy(t, slot):
        row = ids_ref[base + t]            # scalar read from SMEM
        return pltpu.make_async_copy(
            table_ref.at[pl.ds(row, 1), :],      # HBM source row
            rows_vmem.at[pl.ds(t, 1), :],        # VMEM destination row
            sems.at[slot],
        )

    def wait_slot(slot):
        # Wait only needs the semaphore + transfer size; every row copy has
        # the same size, so a descriptor at index 0 is sufficient.
        pltpu.make_async_copy(
            table_ref.at[pl.ds(0, 1), :],
            rows_vmem.at[pl.ds(0, 1), :],
            sems.at[slot],
        ).wait()

    # Prime: k row DMAs in flight (static unroll, k <= _N_INFLIGHT).
    for t in range(k):
        row_copy(t, t).start()

    # Steady state: retire the oldest DMA in this slot, reissue it.
    @pl.loop(k, tb)
    def _(t):
        slot = t % k
        wait_slot(slot)
        row_copy(t, slot).start()

    # Drain: exactly one outstanding DMA per slot remains.
    for slot in range(k):
        wait_slot(slot)

    out_ref[...] = rows_vmem[...]


def _choose_tb(n_tokens: int, d_model: int, itemsize: int, tb_max: int) -> int:
    # Sublane tile by dtype: 8 (f32), 16 (bf16), 32 (int8/fp8).
    sublane = max(8, 32 // itemsize)
    row_bytes = d_model * itemsize
    # VMEM holds: DMA landing scratch + double-buffered output tile = 3 tiles.
    # Budget ~16 MiB so the request is honest on v7x (64 MiB/TC).
    tb_vmem = max(sublane, ((16 << 20) // (3 * row_bytes)) // sublane * sublane)
    tb = min(tb_max, tb_vmem, _round_up(n_tokens, sublane))
    tb = max(sublane, (tb // sublane) * sublane)
    # Prefer >= 2 grid steps so both v7x TensorCores get work.
    while tb > sublane and pl.cdiv(n_tokens, tb) < 2:
        tb = max(sublane, _round_up(tb // 2, sublane))
    return tb


def _make_embedder(d_model: int, tb: int, n_pad: int, dtype):
    itemsize = jnp.dtype(dtype).itemsize
    tile_bytes = tb * d_model * itemsize
    # landing scratch + double-buffered output tile (+ headroom)
    needed = 3 * tile_bytes
    vmem_limit = int(min(max(needed + (4 << 20), 16 << 20), 48 << 20))

    grid_spec = pltpu.PrefetchScalarGridSpec(
        num_scalar_prefetch=1,                     # flat ids -> SMEM
        grid=(n_pad // tb,),
        in_specs=[pl.BlockSpec(memory_space=pl.ANY)],   # table stays in HBM
        out_specs=pl.BlockSpec((tb, d_model), lambda i, ids: (i, 0)),
        scratch_shapes=[
            pltpu.VMEM((tb, d_model), dtype),           # DMA landing buffer
            pltpu.SemaphoreType.DMA((_N_INFLIGHT,)),
        ],
    )

    cost = pl.CostEstimate(
        flops=0,
        transcendentals=0,
        bytes_accessed=int(2 * n_pad * d_model * itemsize + n_pad * 4),
    )

    return pl.pallas_call(
        _embed_gather_kernel,
        grid_spec=grid_spec,
        out_shape=jax.ShapeDtypeStruct((n_pad, d_model), dtype),
        compiler_params=pltpu.CompilerParams(
            dimension_semantics=("parallel",),
            vmem_limit_bytes=vmem_limit,
        ),
        cost_estimate=cost,
    )


def embedder_forward(x_ids, table, tb_max: int = 2048):
    """x_ids: (B, S) int -> (B, S, d_model) in table.dtype (nn.Embedding fwd)."""
    B, S = x_ids.shape
    vocab, d_model = table.shape
    itemsize = jnp.dtype(table.dtype).itemsize
    # d_model is ideally a multiple of 128 (lane-dense output); full-extent
    # lane blocks remain correct otherwise.

    n = B * S
    tb = _choose_tb(n, d_model, itemsize, tb_max)
    n_pad = _round_up(n, tb)

    ids = x_ids.reshape(-1).astype(jnp.int32)
    if n_pad != n:
        # Pad with id 0 (a valid row) so every DMA is in-bounds; padded output
        # rows are trimmed below.
        ids = jnp.pad(ids, (0, n_pad - n))

    run = _make_embedder(d_model, tb, n_pad, table.dtype)
    out = run(ids, table)                      # scalar-prefetch arg first
    return out[:n].reshape(B, S, d_model)


if __name__ == "__main__":
    vocab_size = 32
    d_model = 128
    padding_idx = 0
    B, S = 2, 8

    key = jax.random.PRNGKey(0)
    k_w, k_x = jax.random.split(key)

    # nn.Embedding init: weight ~ N(0, 1), padding_idx row zeroed.
    table = jax.random.normal(k_w, (vocab_size, d_model), dtype=jnp.float32)
    table = table.at[padding_idx].set(0.0)

    # Token ids, include some padding tokens (id == padding_idx).
    x = jax.random.randint(k_x, (B, S), 0, vocab_size, dtype=jnp.int32)
    x = x.at[0, -1].set(padding_idx)

    out = jax.block_until_ready(embedder_forward(x, table))

    # Reference: plain JAX gather (semantics of nn.Embedding forward).
    ref = jnp.take(table, x, axis=0)
    assert out.shape == (B, S, d_model)
    assert jnp.allclose(out, ref, atol=1e-6), "mismatch vs reference gather"
    assert jnp.allclose(out[0, -1], jnp.zeros((d_model,))), "padding row not zero"

    print("KERNEL_OK")
</pallas_src>

<mosaic_0001>
module attributes {stable_mosaic.version = 11 : i64} {
  func.func @_embed_gather_kernel(%arg0: i32, %arg1: memref<16xi32, #tpu.memory_space<smem>>, %arg2: memref<32x128xf32, #tpu.memory_space<any>>, %arg3: memref<8x128xf32, #tpu.memory_space<vmem>>, %arg4: memref<8x128xf32, #tpu.memory_space<vmem>>, %arg5: memref<16x!tpu.dma_semaphore, #tpu.memory_space<semaphore_mem>>) attributes {dimension_semantics = [#tpu.dimension_semantics<parallel>], iteration_bounds = array<i64: 2>, scalar_prefetch = 1 : i64, scratch_operands = 2 : i64, tpu.core_type = #tpu.core_type<tc>, window_params = [{}, {transform_indices = @transform_1, window_bounds = array<i64: 8, 128>}]} {
    %c8_i32 = arith.constant 8 : i32
    %0 = arith.muli %arg0, %c8_i32 : i32
    %c0_i32 = arith.constant 0 : i32
    %1 = arith.addi %0, %c0_i32 : i32
    %2 = arith.index_cast %1 : i32 to index
    %3 = memref.load %arg1[%2] : memref<16xi32, #tpu.memory_space<smem>>
    %c0_i32_0 = arith.constant 0 : i32
    %c0_i32_1 = arith.constant 0 : i32
    %4 = tpu.memref_slice %arg2[%3, %c0_i32_1] : memref<32x128xf32, #tpu.memory_space<any>> -> memref<1x128xf32, #tpu.memory_space<any>>
    %c0_i32_2 = arith.constant 0 : i32
    %c0_i32_3 = arith.constant 0 : i32
    %5 = tpu.memref_slice %arg4[%c0_i32_2, %c0_i32_3] : memref<8x128xf32, #tpu.memory_space<vmem>> -> memref<1x128xf32, #tpu.memory_space<vmem>>
    %6 = tpu.memref_slice %arg5[%c0_i32_0] : memref<16x!tpu.dma_semaphore, #tpu.memory_space<semaphore_mem>> -> memref<1x!tpu.dma_semaphore, #tpu.memory_space<semaphore_mem>>
    %7 = tpu.memref_squeeze %6 : memref<1x!tpu.dma_semaphore, #tpu.memory_space<semaphore_mem>> -> memref<!tpu.dma_semaphore, #tpu.memory_space<semaphore_mem>>
    tpu.enqueue_dma source(%4 : memref<1x128xf32, #tpu.memory_space<any>>) target(%5 : memref<1x128xf32, #tpu.memory_space<vmem>>) target_semaphore(%7 : memref<!tpu.dma_semaphore, #tpu.memory_space<semaphore_mem>>)
    %c1_i32 = arith.constant 1 : i32
    %8 = arith.addi %0, %c1_i32 : i32
    %9 = arith.index_cast %8 : i32 to index
    %10 = memref.load %arg1[%9] : memref<16xi32, #tpu.memory_space<smem>>
    %c1_i32_4 = arith.constant 1 : i32
    %c0_i32_5 = arith.constant 0 : i32
    %11 = tpu.memref_slice %arg2[%10, %c0_i32_5] : memref<32x128xf32, #tpu.memory_space<any>> -> memref<1x128xf32, #tpu.memory_space<any>>
    %c1_i32_6 = arith.constant 1 : i32
    %c0_i32_7 = arith.constant 0 : i32
    %12 = tpu.memref_slice %arg4[%c1_i32_6, %c0_i32_7] : memref<8x128xf32, #tpu.memory_space<vmem>> -> memref<1x128xf32, #tpu.memory_space<vmem>>
    %13 = tpu.memref_slice %arg5[%c1_i32_4] : memref<16x!tpu.dma_semaphore, #tpu.memory_space<semaphore_mem>> -> memref<1x!tpu.dma_semaphore, #tpu.memory_space<semaphore_mem>>
    %14 = tpu.memref_squeeze %13 : memref<1x!tpu.dma_semaphore, #tpu.memory_space<semaphore_mem>> -> memref<!tpu.dma_semaphore, #tpu.memory_space<semaphore_mem>>
    tpu.enqueue_dma source(%11 : memref<1x128xf32, #tpu.memory_space<any>>) target(%12 : memref<1x128xf32, #tpu.memory_space<vmem>>) target_semaphore(%14 : memref<!tpu.dma_semaphore, #tpu.memory_space<semaphore_mem>>)
    %c2_i32 = arith.constant 2 : i32
    %15 = arith.addi %0, %c2_i32 : i32
    %16 = arith.index_cast %15 : i32 to index
    %17 = memref.load %arg1[%16] : memref<16xi32, #tpu.memory_space<smem>>
    %c2_i32_8 = arith.constant 2 : i32
    %c0_i32_9 = arith.constant 0 : i32
    %18 = tpu.memref_slice %arg2[%17, %c0_i32_9] : memref<32x128xf32, #tpu.memory_space<any>> -> memref<1x128xf32, #tpu.memory_space<any>>
    %c2_i32_10 = arith.constant 2 : i32
    %c0_i32_11 = arith.constant 0 : i32
    %19 = tpu.memref_slice %arg4[%c2_i32_10, %c0_i32_11] : memref<8x128xf32, #tpu.memory_space<vmem>> -> memref<1x128xf32, #tpu.memory_space<vmem>>
    %20 = tpu.memref_slice %arg5[%c2_i32_8] : memref<16x!tpu.dma_semaphore, #tpu.memory_space<semaphore_mem>> -> memref<1x!tpu.dma_semaphore, #tpu.memory_space<semaphore_mem>>
    %21 = tpu.memref_squeeze %20 : memref<1x!tpu.dma_semaphore, #tpu.memory_space<semaphore_mem>> -> memref<!tpu.dma_semaphore, #tpu.memory_space<semaphore_mem>>
    tpu.enqueue_dma source(%18 : memref<1x128xf32, #tpu.memory_space<any>>) target(%19 : memref<1x128xf32, #tpu.memory_space<vmem>>) target_semaphore(%21 : memref<!tpu.dma_semaphore, #tpu.memory_space<semaphore_mem>>)
    %c3_i32 = arith.constant 3 : i32
    %22 = arith.addi %0, %c3_i32 : i32
    %23 = arith.index_cast %22 : i32 to index
    %24 = memref.load %arg1[%23] : memref<16xi32, #tpu.memory_space<smem>>
    %c3_i32_12 = arith.constant 3 : i32
    %c0_i32_13 = arith.constant 0 : i32
    %25 = tpu.memref_slice %arg2[%24, %c0_i32_13] : memref<32x128xf32, #tpu.memory_space<any>> -> memref<1x128xf32, #tpu.memory_space<any>>
    %c3_i32_14 = arith.constant 3 : i32
    %c0_i32_15 = arith.constant 0 : i32
    %26 = tpu.memref_slice %arg4[%c3_i32_14, %c0_i32_15] : memref<8x128xf32, #tpu.memory_space<vmem>> -> memref<1x128xf32, #tpu.memory_space<vmem>>
    %27 = tpu.memref_slice %arg5[%c3_i32_12] : memref<16x!tpu.dma_semaphore, #tpu.memory_space<semaphore_mem>> -> memref<1x!tpu.dma_semaphore, #tpu.memory_space<semaphore_mem>>
    %28 = tpu.memref_squeeze %27 : memref<1x!tpu.dma_semaphore, #tpu.memory_space<semaphore_mem>> -> memref<!tpu.dma_semaphore, #tpu.memory_space<semaphore_mem>>
    tpu.enqueue_dma source(%25 : memref<1x128xf32, #tpu.memory_space<any>>) target(%26 : memref<1x128xf32, #tpu.memory_space<vmem>>) target_semaphore(%28 : memref<!tpu.dma_semaphore, #tpu.memory_space<semaphore_mem>>)
    %c4_i32 = arith.constant 4 : i32
    %29 = arith.addi %0, %c4_i32 : i32
    %30 = arith.index_cast %29 : i32 to index
    %31 = memref.load %arg1[%30] : memref<16xi32, #tpu.memory_space<smem>>
    %c4_i32_16 = arith.constant 4 : i32
    %c0_i32_17 = arith.constant 0 : i32
    %32 = tpu.memref_slice %arg2[%31, %c0_i32_17] : memref<32x128xf32, #tpu.memory_space<any>> -> memref<1x128xf32, #tpu.memory_space<any>>
    %c4_i32_18 = arith.constant 4 : i32
    %c0_i32_19 = arith.constant 0 : i32
    %33 = tpu.memref_slice %arg4[%c4_i32_18, %c0_i32_19] : memref<8x128xf32, #tpu.memory_space<vmem>> -> memref<1x128xf32, #tpu.memory_space<vmem>>
    %34 = tpu.memref_slice %arg5[%c4_i32_16] : memref<16x!tpu.dma_semaphore, #tpu.memory_space<semaphore_mem>> -> memref<1x!tpu.dma_semaphore, #tpu.memory_space<semaphore_mem>>
    %35 = tpu.memref_squeeze %34 : memref<1x!tpu.dma_semaphore, #tpu.memory_space<semaphore_mem>> -> memref<!tpu.dma_semaphore, #tpu.memory_space<semaphore_mem>>
    tpu.enqueue_dma source(%32 : memref<1x128xf32, #tpu.memory_space<any>>) target(%33 : memref<1x128xf32, #tpu.memory_space<vmem>>) target_semaphore(%35 : memref<!tpu.dma_semaphore, #tpu.memory_space<semaphore_mem>>)
    %c5_i32 = arith.constant 5 : i32
    %36 = arith.addi %0, %c5_i32 : i32
    %37 = arith.index_cast %36 : i32 to index
    %38 = memref.load %arg1[%37] : memref<16xi32, #tpu.memory_space<smem>>
    %c5_i32_20 = arith.constant 5 : i32
    %c0_i32_21 = arith.constant 0 : i32
    %39 = tpu.memref_slice %arg2[%38, %c0_i32_21] : memref<32x128xf32, #tpu.memory_space<any>> -> memref<1x128xf32, #tpu.memory_space<any>>
    %c5_i32_22 = arith.constant 5 : i32
    %c0_i32_23 = arith.constant 0 : i32
    %40 = tpu.memref_slice %arg4[%c5_i32_22, %c0_i32_23] : memref<8x128xf32, #tpu.memory_space<vmem>> -> memref<1x128xf32, #tpu.memory_space<vmem>>
    %41 = tpu.memref_slice %arg5[%c5_i32_20] : memref<16x!tpu.dma_semaphore, #tpu.memory_space<semaphore_mem>> -> memref<1x!tpu.dma_semaphore, #tpu.memory_space<semaphore_mem>>
    %42 = tpu.memref_squeeze %41 : memref<1x!tpu.dma_semaphore, #tpu.memory_space<semaphore_mem>> -> memref<!tpu.dma_semaphore, #tpu.memory_space<semaphore_mem>>
    tpu.enqueue_dma source(%39 : memref<1x128xf32, #tpu.memory_space<any>>) target(%40 : memref<1x128xf32, #tpu.memory_space<vmem>>) target_semaphore(%42 : memref<!tpu.dma_semaphore, #tpu.memory_space<semaphore_mem>>)
    %c6_i32 = arith.constant 6 : i32
    %43 = arith.addi %0, %c6_i32 : i32
    %44 = arith.index_cast %43 : i32 to index
    %45 = memref.load %arg1[%44] : memref<16xi32, #tpu.memory_space<smem>>
    %c6_i32_24 = arith.constant 6 : i32
    %c0_i32_25 = arith.constant 0 : i32
    %46 = tpu.memref_slice %arg2[%45, %c0_i32_25] : memref<32x128xf32, #tpu.memory_space<any>> -> memref<1x128xf32, #tpu.memory_space<any>>
    %c6_i32_26 = arith.constant 6 : i32
    %c0_i32_27 = arith.constant 0 : i32
    %47 = tpu.memref_slice %arg4[%c6_i32_26, %c0_i32_27] : memref<8x128xf32, #tpu.memory_space<vmem>> -> memref<1x128xf32, #tpu.memory_space<vmem>>
    %48 = tpu.memref_slice %arg5[%c6_i32_24] : memref<16x!tpu.dma_semaphore, #tpu.memory_space<semaphore_mem>> -> memref<1x!tpu.dma_semaphore, #tpu.memory_space<semaphore_mem>>
    %49 = tpu.memref_squeeze %48 : memref<1x!tpu.dma_semaphore, #tpu.memory_space<semaphore_mem>> -> memref<!tpu.dma_semaphore, #tpu.memory_space<semaphore_mem>>
    tpu.enqueue_dma source(%46 : memref<1x128xf32, #tpu.memory_space<any>>) target(%47 : memref<1x128xf32, #tpu.memory_space<vmem>>) target_semaphore(%49 : memref<!tpu.dma_semaphore, #tpu.memory_space<semaphore_mem>>)
    %c7_i32 = arith.constant 7 : i32
    %50 = arith.addi %0, %c7_i32 : i32
    %51 = arith.index_cast %50 : i32 to index
    %52 = memref.load %arg1[%51] : memref<16xi32, #tpu.memory_space<smem>>
    %c7_i32_28 = arith.constant 7 : i32
    %c0_i32_29 = arith.constant 0 : i32
    %53 = tpu.memref_slice %arg2[%52, %c0_i32_29] : memref<32x128xf32, #tpu.memory_space<any>> -> memref<1x128xf32, #tpu.memory_space<any>>
    %c7_i32_30 = arith.constant 7 : i32
    %c0_i32_31 = arith.constant 0 : i32
    %54 = tpu.memref_slice %arg4[%c7_i32_30, %c0_i32_31] : memref<8x128xf32, #tpu.memory_space<vmem>> -> memref<1x128xf32, #tpu.memory_space<vmem>>
    %55 = tpu.memref_slice %arg5[%c7_i32_28] : memref<16x!tpu.dma_semaphore, #tpu.memory_space<semaphore_mem>> -> memref<1x!tpu.dma_semaphore, #tpu.memory_space<semaphore_mem>>
    %56 = tpu.memref_squeeze %55 : memref<1x!tpu.dma_semaphore, #tpu.memory_space<semaphore_mem>> -> memref<!tpu.dma_semaphore, #tpu.memory_space<semaphore_mem>>
    tpu.enqueue_dma source(%53 : memref<1x128xf32, #tpu.memory_space<any>>) target(%54 : memref<1x128xf32, #tpu.memory_space<vmem>>) target_semaphore(%56 : memref<!tpu.dma_semaphore, #tpu.memory_space<semaphore_mem>>)
    %c0_i32_32 = arith.constant 0 : i32
    %c0_i32_33 = arith.constant 0 : i32
    %57 = arith.addi %c0_i32_32, %c0_i32_33 : i32
    %c1_i32_34 = arith.constant 1 : i32
    scf.for %arg6 = %c0_i32_32 to %57 step %c1_i32_34  : i32 {
      %c1_i32_79 = arith.constant 1 : i32
      %92 = arith.muli %arg6, %c1_i32_79 : i32
      %c8_i32_80 = arith.constant 8 : i32
      %93 = arith.addi %c8_i32_80, %92 : i32
      %c8_i32_81 = arith.constant 8 : i32
      %c0_i32_82 = arith.constant 0 : i32
      %94 = arith.cmpi eq, %c8_i32_81, %c0_i32_82 : i32
      %c1_i32_83 = arith.constant 1 : i32
      %95 = arith.select %94, %c1_i32_83, %c8_i32_81 : i32
      %96 = arith.remsi %93, %95 : i32
      %c0_i32_84 = arith.constant 0 : i32
      %97 = arith.cmpi ne, %96, %c0_i32_84 : i32
      %c0_i32_85 = arith.constant 0 : i32
      %98 = arith.cmpi slt, %96, %c0_i32_85 : i32
      %c0_i32_86 = arith.constant 0 : i32
      %99 = arith.cmpi slt, %95, %c0_i32_86 : i32
      %100 = arith.xori %98, %99 : i1
      %101 = arith.andi %100, %97 : i1
      %102 = arith.addi %96, %95 : i32
      %103 = arith.select %101, %102, %96 : i32
      %c0_i32_87 = arith.constant 0 : i32
      %c0_i32_88 = arith.constant 0 : i32
      %104 = tpu.memref_slice %arg2[%c0_i32_87, %c0_i32_88] : memref<32x128xf32, #tpu.memory_space<any>> -> memref<1x128xf32, #tpu.memory_space<any>>
      %c0_i32_89 = arith.constant 0 : i32
      %c0_i32_90 = arith.constant 0 : i32
      %105 = tpu.memref_slice %arg4[%c0_i32_89, %c0_i32_90] : memref<8x128xf32, #tpu.memory_space<vmem>> -> memref<1x128xf32, #tpu.memory_space<vmem>>
      %106 = tpu.memref_slice %arg5[%103] : memref<16x!tpu.dma_semaphore, #tpu.memory_space<semaphore_mem>> -> memref<1x!tpu.dma_semaphore, #tpu.memory_space<semaphore_mem>>
      %107 = tpu.memref_squeeze %106 : memref<1x!tpu.dma_semaphore, #tpu.memory_space<semaphore_mem>> -> memref<!tpu.dma_semaphore, #tpu.memory_space<semaphore_mem>>
      tpu.wait_dma2 semaphore(%107 : memref<!tpu.dma_semaphore, #tpu.memory_space<semaphore_mem>>) src(%104 : memref<1x128xf32, #tpu.memory_space<any>>) dst(%105 : memref<1x128xf32, #tpu.memory_space<vmem>>)
      %108 = arith.addi %0, %93 : i32
      %109 = arith.index_cast %108 : i32 to index
      %110 = memref.load %arg1[%109] : memref<16xi32, #tpu.memory_space<smem>>
      %c0_i32_91 = arith.constant 0 : i32
      %111 = tpu.memref_slice %arg2[%110, %c0_i32_91] : memref<32x128xf32, #tpu.memory_space<any>> -> memref<1x128xf32, #tpu.memory_space<any>>
      %c0_i32_92 = arith.constant 0 : i32
      %112 = tpu.memref_slice %arg4[%93, %c0_i32_92] : memref<8x128xf32, #tpu.memory_space<vmem>> -> memref<1x128xf32, #tpu.memory_space<vmem>>
      %113 = tpu.memref_slice %arg5[%103] : memref<16x!tpu.dma_semaphore, #tpu.memory_space<semaphore_mem>> -> memref<1x!tpu.dma_semaphore, #tpu.memory_space<semaphore_mem>>
      %114 = tpu.memref_squeeze %113 : memref<1x!tpu.dma_semaphore, #tpu.memory_space<semaphore_mem>> -> memref<!tpu.dma_semaphore, #tpu.memory_space<semaphore_mem>>
      tpu.enqueue_dma source(%111 : memref<1x128xf32, #tpu.memory_space<any>>) target(%112 : memref<1x128xf32, #tpu.memory_space<vmem>>) target_semaphore(%114 : memref<!tpu.dma_semaphore, #tpu.memory_space<semaphore_mem>>)
    }
    %c0_i32_35 = arith.constant 0 : i32
    %c0_i32_36 = arith.constant 0 : i32
    %c0_i32_37 = arith.constant 0 : i32
    %c0_i32_38 = arith.constant 0 : i32
    %58 = tpu.memref_slice %arg2[%c0_i32_37, %c0_i32_38] : memref<32x128xf32, #tpu.memory_space<any>> -> memref<1x128xf32, #tpu.memory_space<any>>
    %c0_i32_39 = arith.constant 0 : i32
    %c0_i32_40 = arith.constant 0 : i32
    %59 = tpu.memref_slice %arg4[%c0_i32_39, %c0_i32_40] : memref<8x128xf32, #tpu.memory_space<vmem>> -> memref<1x128xf32, #tpu.memory_space<vmem>>
    %60 = tpu.memref_slice %arg5[%c0_i32_36] : memref<16x!tpu.dma_semaphore, #tpu.memory_space<semaphore_mem>> -> memref<1x!tpu.dma_semaphore, #tpu.memory_space<semaphore_mem>>
    %61 = tpu.memref_squeeze %60 : memref<1x!tpu.dma_semaphore, #tpu.memory_space<semaphore_mem>> -> memref<!tpu.dma_semaphore, #tpu.memory_space<semaphore_mem>>
    tpu.wait_dma2 semaphore(%61 : memref<!tpu.dma_semaphore, #tpu.memory_space<semaphore_mem>>) src(%58 : memref<1x128xf32, #tpu.memory_space<any>>) dst(%59 : memref<1x128xf32, #tpu.memory_space<vmem>>)
    %c1_i32_41 = arith.constant 1 : i32
    %c0_i32_42 = arith.constant 0 : i32
    %c0_i32_43 = arith.constant 0 : i32
    %62 = tpu.memref_slice %arg2[%c0_i32_42, %c0_i32_43] : memref<32x128xf32, #tpu.memory_space<any>> -> memref<1x128xf32, #tpu.memory_space<any>>
    %c0_i32_44 = arith.constant 0 : i32
    %c0_i32_45 = arith.constant 0 : i32
    %63 = tpu.memref_slice %arg4[%c0_i32_44, %c0_i32_45] : memref<8x128xf32, #tpu.memory_space<vmem>> -> memref<1x128xf32, #tpu.memory_space<vmem>>
    %64 = tpu.memref_slice %arg5[%c1_i32_41] : memref<16x!tpu.dma_semaphore, #tpu.memory_space<semaphore_mem>> -> memref<1x!tpu.dma_semaphore, #tpu.memory_space<semaphore_mem>>
    %65 = tpu.memref_squeeze %64 : memref<1x!tpu.dma_semaphore, #tpu.memory_space<semaphore_mem>> -> memref<!tpu.dma_semaphore, #tpu.memory_space<semaphore_mem>>
    tpu.wait_dma2 semaphore(%65 : memref<!tpu.dma_semaphore, #tpu.memory_space<semaphore_mem>>) src(%62 : memref<1x128xf32, #tpu.memory_space<any>>) dst(%63 : memref<1x128xf32, #tpu.memory_space<vmem>>)
    %c2_i32_46 = arith.constant 2 : i32
    %c0_i32_47 = arith.constant 0 : i32
    %c0_i32_48 = arith.constant 0 : i32
    %66 = tpu.memref_slice %arg2[%c0_i32_47, %c0_i32_48] : memref<32x128xf32, #tpu.memory_space<any>> -> memref<1x128xf32, #tpu.memory_space<any>>
    %c0_i32_49 = arith.constant 0 : i32
    %c0_i32_50 = arith.constant 0 : i32
    %67 = tpu.memref_slice %arg4[%c0_i32_49, %c0_i32_50] : memref<8x128xf32, #tpu.memory_space<vmem>> -> memref<1x128xf32, #tpu.memory_space<vmem>>
    %68 = tpu.memref_slice %arg5[%c2_i32_46] : memref<16x!tpu.dma_semaphore, #tpu.memory_space<semaphore_mem>> -> memref<1x!tpu.dma_semaphore, #tpu.memory_space<semaphore_mem>>
    %69 = tpu.memref_squeeze %68 : memref<1x!tpu.dma_semaphore, #tpu.memory_space<semaphore_mem>> -> memref<!tpu.dma_semaphore, #tpu.memory_space<semaphore_mem>>
    tpu.wait_dma2 semaphore(%69 : memref<!tpu.dma_semaphore, #tpu.memory_space<semaphore_mem>>) src(%66 : memref<1x128xf32, #tpu.memory_space<any>>) dst(%67 : memref<1x128xf32, #tpu.memory_space<vmem>>)
    %c3_i32_51 = arith.constant 3 : i32
    %c0_i32_52 = arith.constant 0 : i32
    %c0_i32_53 = arith.constant 0 : i32
    %70 = tpu.memref_slice %arg2[%c0_i32_52, %c0_i32_53] : memref<32x128xf32, #tpu.memory_space<any>> -> memref<1x128xf32, #tpu.memory_space<any>>
    %c0_i32_54 = arith.constant 0 : i32
    %c0_i32_55 = arith.constant 0 : i32
    %71 = tpu.memref_slice %arg4[%c0_i32_54, %c0_i32_55] : memref<8x128xf32, #tpu.memory_space<vmem>> -> memref<1x128xf32, #tpu.memory_space<vmem>>
    %72 = tpu.memref_slice %arg5[%c3_i32_51] : memref<16x!tpu.dma_semaphore, #tpu.memory_space<semaphore_mem>> -> memref<1x!tpu.dma_semaphore, #tpu.memory_space<semaphore_mem>>
    %73 = tpu.memref_squeeze %72 : memref<1x!tpu.dma_semaphore, #tpu.memory_space<semaphore_mem>> -> memref<!tpu.dma_semaphore, #tpu.memory_space<semaphore_mem>>
    tpu.wait_dma2 semaphore(%73 : memref<!tpu.dma_semaphore, #tpu.memory_space<semaphore_mem>>) src(%70 : memref<1x128xf32, #tpu.memory_space<any>>) dst(%71 : memref<1x128xf32, #tpu.memory_space<vmem>>)
    %c4_i32_56 = arith.constant 4 : i32
    %c0_i32_57 = arith.constant 0 : i32
    %c0_i32_58 = arith.constant 0 : i32
    %74 = tpu.memref_slice %arg2[%c0_i32_57, %c0_i32_58] : memref<32x128xf32, #tpu.memory_space<any>> -> memref<1x128xf32, #tpu.memory_space<any>>
    %c0_i32_59 = arith.constant 0 : i32
    %c0_i32_60 = arith.constant 0 : i32
    %75 = tpu.memref_slice %arg4[%c0_i32_59, %c0_i32_60] : memref<8x128xf32, #tpu.memory_space<vmem>> -> memref<1x128xf32, #tpu.memory_space<vmem>>
    %76 = tpu.memref_slice %arg5[%c4_i32_56] : memref<16x!tpu.dma_semaphore, #tpu.memory_space<semaphore_mem>> -> memref<1x!tpu.dma_semaphore, #tpu.memory_space<semaphore_mem>>
    %77 = tpu.memref_squeeze %76 : memref<1x!tpu.dma_semaphore, #tpu.memory_space<semaphore_mem>> -> memref<!tpu.dma_semaphore, #tpu.memory_space<semaphore_mem>>
    tpu.wait_dma2 semaphore(%77 : memref<!tpu.dma_semaphore, #tpu.memory_space<semaphore_mem>>) src(%74 : memref<1x128xf32, #tpu.memory_space<any>>) dst(%75 : memref<1x128xf32, #tpu.memory_space<vmem>>)
    %c5_i32_61 = arith.constant 5 : i32
    %c0_i32_62 = arith.constant 0 : i32
    %c0_i32_63 = arith.constant 0 : i32
    %78 = tpu.memref_slice %arg2[%c0_i32_62, %c0_i32_63] : memref<32x128xf32, #tpu.memory_space<any>> -> memref<1x128xf32, #tpu.memory_space<any>>
    %c0_i32_64 = arith.constant 0 : i32
    %c0_i32_65 = arith.constant 0 : i32
    %79 = tpu.memref_slice %arg4[%c0_i32_64, %c0_i32_65] : memref<8x128xf32, #tpu.memory_space<vmem>> -> memref<1x128xf32, #tpu.memory_space<vmem>>
    %80 = tpu.memref_slice %arg5[%c5_i32_61] : memref<16x!tpu.dma_semaphore, #tpu.memory_space<semaphore_mem>> -> memref<1x!tpu.dma_semaphore, #tpu.memory_space<semaphore_mem>>
    %81 = tpu.memref_squeeze %80 : memref<1x!tpu.dma_semaphore, #tpu.memory_space<semaphore_mem>> -> memref<!tpu.dma_semaphore, #tpu.memory_space<semaphore_mem>>
    tpu.wait_dma2 semaphore(%81 : memref<!tpu.dma_semaphore, #tpu.memory_space<semaphore_mem>>) src(%78 : memref<1x128xf32, #tpu.memory_space<any>>) dst(%79 : memref<1x128xf32, #tpu.memory_space<vmem>>)
    %c6_i32_66 = arith.constant 6 : i32
    %c0_i32_67 = arith.constant 0 : i32
    %c0_i32_68 = arith.constant 0 : i32
    %82 = tpu.memref_slice %arg2[%c0_i32_67, %c0_i32_68] : memref<32x128xf32, #tpu.memory_space<any>> -> memref<1x128xf32, #tpu.memory_space<any>>
    %c0_i32_69 = arith.constant 0 : i32
    %c0_i32_70 = arith.constant 0 : i32
    %83 = tpu.memref_slice %arg4[%c0_i32_69, %c0_i32_70] : memref<8x128xf32, #tpu.memory_space<vmem>> -> memref<1x128xf32, #tpu.memory_space<vmem>>
    %84 = tpu.memref_slice %arg5[%c6_i32_66] : memref<16x!tpu.dma_semaphore, #tpu.memory_space<semaphore_mem>> -> memref<1x!tpu.dma_semaphore, #tpu.memory_space<semaphore_mem>>
    %85 = tpu.memref_squeeze %84 : memref<1x!tpu.dma_semaphore, #tpu.memory_space<semaphore_mem>> -> memref<!tpu.dma_semaphore, #tpu.memory_space<semaphore_mem>>
    tpu.wait_dma2 semaphore(%85 : memref<!tpu.dma_semaphore, #tpu.memory_space<semaphore_mem>>) src(%82 : memref<1x128xf32, #tpu.memory_space<any>>) dst(%83 : memref<1x128xf32, #tpu.memory_space<vmem>>)
    %c7_i32_71 = arith.constant 7 : i32
    %c0_i32_72 = arith.constant 0 : i32
    %c0_i32_73 = arith.constant 0 : i32
    %86 = tpu.memref_slice %arg2[%c0_i32_72, %c0_i32_73] : memref<32x128xf32, #tpu.memory_space<any>> -> memref<1x128xf32, #tpu.memory_space<any>>
    %c0_i32_74 = arith.constant 0 : i32
    %c0_i32_75 = arith.constant 0 : i32
    %87 = tpu.memref_slice %arg4[%c0_i32_74, %c0_i32_75] : memref<8x128xf32, #tpu.memory_space<vmem>> -> memref<1x128xf32, #tpu.memory_space<vmem>>
    %88 = tpu.memref_slice %arg5[%c7_i32_71] : memref<16x!tpu.dma_semaphore, #tpu.memory_space<semaphore_mem>> -> memref<1x!tpu.dma_semaphore, #tpu.memory_space<semaphore_mem>>
    %89 = tpu.memref_squeeze %88 : memref<1x!tpu.dma_semaphore, #tpu.memory_space<semaphore_mem>> -> memref<!tpu.dma_semaphore, #tpu.memory_space<semaphore_mem>>
    tpu.wait_dma2 semaphore(%89 : memref<!tpu.dma_semaphore, #tpu.memory_space<semaphore_mem>>) src(%86 : memref<1x128xf32, #tpu.memory_space<any>>) dst(%87 : memref<1x128xf32, #tpu.memory_space<vmem>>)
    %c0 = arith.constant 0 : index
    %c0_76 = arith.constant 0 : index
    %90 = vector.load %arg4[%c0, %c0_76] : memref<8x128xf32, #tpu.memory_space<vmem>>, vector<8x128xf32>
    %c0_77 = arith.constant 0 : index
    %c0_78 = arith.constant 0 : index
    %91 = vector.load %arg3[%c0_77, %c0_78] : memref<8x128xf32, #tpu.memory_space<vmem>>, vector<8x128xf32>
    tpu.vector_store %arg3[%c0_77, %c0_78], %90 {strides = array<i32>} : memref<8x128xf32, #tpu.memory_space<vmem>>, vector<8x128xf32>,
    return
  }
  func.func @transform_1(%arg0: i32, %arg1: memref<16xi32, #tpu.memory_space<smem>>) -> (i32, i32) {
    %c0_i32 = arith.constant 0 : i32
    %c0_i32_0 = arith.constant 0 : i32
    return %arg0, %c0_i32 : i32, i32
  }
}

</mosaic_0001>

<llo_original>
// kernel: tpu_custom_call.1
$region0: #{tpu_custom_call.1}
  #allocation0 [shape = 'u32[]', space=smem, size = 0x4, offset = 0x4, fixed_abs, tag = 'smem constant byte address 0x4 - core index']
  #allocation1 [shape = 'u32[144,128]{1,0:T(1,128)}', space=vmem, size = 0x12000, scoped, tag = 'internal scratch']
  #allocation2 [shape = 'f32[8,128]{1,0:T(8,128)}', space=vmem, size = 0x1000, scoped, tag = 'scratch operand']
  #allocation3 [shape = 's32[16]{0}', space=sflag, size = 0x40, scoped, tag = 'scratch operand']
  #allocation4 [shape = 's32[1]{0}', space=sflag, size = 0x4, scoped, tag = 'scoped memory for tpu_custom_call.1']
  #allocation5 [shape = 'u8[512]{0}', space=smem, size = 0x200, scoped, tag = 'prefetched SMEM operand 0']
  #allocation8 [shape = 's32[]', space=sflag, size = 0x4, offset = 0, fixed_abs, tag = 'sflag constant byte address 0x0 - dummy sync flag']
  #allocation9 [shape = 's32[]', space=sflag, size = 0x4, offset = 0, fixed_abs, tag = 'sflag constant byte address 0x0 - dummy sync flag']
  #allocation10 [shape = 'u32[]', space=smem, size = 0x4, offset = 0x44, fixed_abs, tag = 'smem constant byte address 0x44 - assertion arg 0']
  #allocation11 [shape = 'u32[]', space=smem, size = 0x4, offset = 0x48, fixed_abs, tag = 'smem constant byte address 0x48 - assertion arg 1']
  #allocation12 [shape = 's32[]', space=sflag, size = 0x4, offset = 0, fixed_abs, tag = 'sflag constant byte address 0x0 - dummy sync flag']
  #allocation13 [shape = 's32[]', space=sflag, size = 0x4, offset = 0, fixed_abs, tag = 'sflag constant byte address 0x0 - dummy sync flag']
  #allocation14 [shape = 's32[]', space=sflag, size = 0x4, offset = 0, fixed_abs, tag = 'sflag constant byte address 0x0 - dummy sync flag']
  #allocation15 [shape = 's32[]', space=sflag, size = 0x4, offset = 0, fixed_abs, tag = 'sflag constant byte address 0x0 - dummy sync flag']
  #allocation16 [shape = 's32[]', space=sflag, size = 0x4, offset = 0, fixed_abs, tag = 'sflag constant byte address 0x0 - dummy sync flag']
  #allocation17 [shape = 's32[]', space=sflag, size = 0x4, offset = 0, fixed_abs, tag = 'sflag constant byte address 0x0 - dummy sync flag']
  #allocation18 [shape = 's32[]', space=sflag, size = 0x4, offset = 0, fixed_abs, tag = 'sflag constant byte address 0x0 - dummy sync flag']
  #allocation19 [shape = 's32[]', space=sflag, size = 0x4, offset = 0, fixed_abs, tag = 'sflag constant byte address 0x0 - dummy sync flag']
  #allocation20 [shape = 's32[]', space=sflag, size = 0x4, offset = 0, fixed_abs, tag = 'sflag constant byte address 0x0 - dummy sync flag']
  #allocation21 [shape = 's32[]', space=sflag, size = 0x4, offset = 0, fixed_abs, tag = 'sflag constant byte address 0x0 - dummy sync flag']
  #allocation22 [shape = 's32[]', space=sflag, size = 0x4, offset = 0, fixed_abs, tag = 'sflag constant byte address 0x0 - dummy sync flag']
  #allocation23 [shape = 's32[]', space=sflag, size = 0x4, offset = 0, fixed_abs, tag = 'sflag constant byte address 0x0 - dummy sync flag']
  #allocation24 [shape = 's32[]', space=sflag, size = 0x4, offset = 0, fixed_abs, tag = 'sflag constant byte address 0x0 - dummy sync flag']
  #allocation25 [shape = 's32[]', space=sflag, size = 0x4, offset = 0, fixed_abs, tag = 'sflag constant byte address 0x0 - dummy sync flag']
  %s0 = inlined_call_operand.hbm [shape: s32[16], index: 0, kind: input, shape index: {}]
  %s1 = inlined_call_operand.hbm [shape: f32[32,128], index: 1, kind: input, shape index: {}]
  %s2 = inlined_call_operand.hbm [shape: f32[16,128], index: 2, kind: output, shape index: {}]
  %s3 = sld [smem:[#allocation0]]
  $region57: #{tpu_custom_call.1} parent=0
    _
  %s5 = ssub.s32 1, %s3
  %s6 = scalar_select 0, %s5, %s3
  %8 = dma.hbm_to_smem %s0, 16, [#allocation5], [#allocation4]
  %9 = dma.done [#allocation4], 16
  %10 = sfence
  $region1: #{tpu_custom_call.1} parent=0
    #allocation6 [shape = 'u8[8192]{0}', space=vmem, size = 0x2000, scoped, tag = 'output window, operand 0']
    #allocation7 [shape = 's32[2]{0}', space=sflag, size = 0x8, scoped, tag = 'scoped memory for tpu_custom_call.1']
    %11 = vsyncpa [#allocation7], 0
    %s12 = scalar_lea.sflag [#allocation7], 1
    %13 = vsyncpa %s12, 0
    loop: start=0, step=1, limit=3
    $region2: #{tpu_custom_call.1} parent=1 // loop_pre_header
      _
    $region3: #{tpu_custom_call.1} parent=1 // loop_header
      %s15 = sphi 0, %s19
      %p16 = scmp.ge.s32.totalorder %s15, 3
      %s24 = sphi 0, %s26
      %s27 = sphi 0, %s24
      %s37 = sphi 0, %s27
    $region4: #{tpu_custom_call.1} parent=1 // loop_header_branch
      %18 = sbr.rel (%p16) target = $region8
    $region5: #{tpu_custom_call.1} parent=1 // loop_body
      %s20 = ssub.s32 %s15, 1
      %s21 = sadd.s32 %s15, 1
      %s22 = ssub.s32 %s15, %s21
      %p23 = scmp.eq.s32.totalorder %s22, 0
      %s25 = sadd.s32 %s24, 1
      %s26 = scalar_select %p23, %s24, %s25
      %p28 = pneg %p23
      %p29 = scmp.eq.s32.totalorder %s15, 1
      %p30 = por %p28, %p29
      %p31 = scmp.ne.s32.totalorder %s24, %s27
      %p32 = scmp.eq.s32.totalorder %s15, 0
      %p33 = por %p31, %p32
      %p34 = scmp.ne.s32.totalorder %s24, %s27
      %p35 = scmp.eq.s32.totalorder %s20, 1
      %p36 = por %p34, %p35
      %p38 = scmp.ne.s32.totalorder %s27, %s37
      %p39 = scmp.eq.s32.totalorder %s20, 0
      %p40 = por %p38, %p39
      %p41 = scmp.lt.s32.totalorder %s15, 2
      // Predicated region
      $region9: #{tpu_custom_call.1} parent=5 // pred_check
        %p42 = pneg %p41
      $region10: #{tpu_custom_call.1} parent=5 // pred_check_branch
        %44 = sbr.rel (%p42) target = $region12
      $region11: #{tpu_custom_call.1} parent=5 // pred_region
        %p45 = pneg %p33
        %p46 = pneg %p30
        %s47 = sand.u32 %s24, 1
        %s48 = scalar_lea.sflag [#allocation7], %s47
        %s49 = sand.u32 %s24, 1
        %s50 = smul.addr %s49, 8
        %s51 = scalar_lea.vmem [#allocation6], %s50
        %s52 = smul.u32 %s15, 8
        %s53 = sld [smem:[#allocation5 + %s52]]
        %s54 = smul.addr %s53, 16
        %s55 = scalar_lea.hbm %s1, %s54
        // Predicated region
        $region13: #{tpu_custom_call.1} parent=11 // pred_check
          _
        $region14: #{tpu_custom_call.1} parent=11 // pred_check_branch
          %57 = sbr.rel target = $region16
        $region15: #{tpu_custom_call.1} parent=11 // pred_region
          %58 = sst [smem:[#allocation10]] [#allocation9]
          %59 = sst [smem:[#allocation11]] [#allocation8]
        $region16: #{tpu_custom_call.1} parent=11 // pred_fallthru
          _
        %61 = shalt.err (0)
        %s63 = sshll.u32 [#allocation2], 4
        %s64 = int_to_ptr.vmem [resolvable:$true] %s63
        %66 = dma.hbm_to_vmem [thread:$0]  %s55, 16, %s64, [#allocation3]
        %s67 = sadd.s32 %s52, 1
        %s68 = sld [smem:[#allocation5 + %s67]]
        %s69 = smul.addr %s68, 16
        %s70 = scalar_lea.hbm %s1, %s69
        %s71 = scalar_lea.vmem [#allocation2], 1
        %s72 = scalar_lea.sflag [#allocation3], 1
        // Predicated region
        $region17: #{tpu_custom_call.1} parent=11 // pred_check
          _
        $region18: #{tpu_custom_call.1} parent=11 // pred_check_branch
          %74 = sbr.rel target = $region20
        $region19: #{tpu_custom_call.1} parent=11 // pred_region
          %75 = sst [smem:[#allocation10]] [#allocation13]
          %76 = sst [smem:[#allocation11]] [#allocation12]
        $region20: #{tpu_custom_call.1} parent=11 // pred_fallthru
          _
        %78 = shalt.err (0)
        %s80 = sshll.u32 %s71, 4
        %s81 = int_to_ptr.vmem [resolvable:$true] %s80
        %83 = dma.hbm_to_vmem [thread:$0]  %s70, 16, %s81, %s72
        %s84 = sadd.s32 %s52, 2
        %s85 = sld [smem:[#allocation5 + %s84]]
        %s86 = smul.addr %s85, 16
        %s87 = scalar_lea.hbm %s1, %s86
        %s88 = scalar_lea.vmem [#allocation2], 2
        %s89 = scalar_lea.sflag [#allocation3], 2
        // Predicated region
        $region21: #{tpu_custom_call.1} parent=11 // pred_check
          _
        $region22: #{tpu_custom_call.1} parent=11 // pred_check_branch
          %91 = sbr.rel target = $region24
        $region23: #{tpu_custom_call.1} parent=11 // pred_region
          %92 = sst [smem:[#allocation10]] [#allocation15]
          %93 = sst [smem:[#allocation11]] [#allocation14]
        $region24: #{tpu_custom_call.1} parent=11 // pred_fallthru
          _
        %95 = shalt.err (0)
        %s97 = sshll.u32 %s88, 4
        %s98 = int_to_ptr.vmem [resolvable:$true] %s97
        %100 = dma.hbm_to_vmem [thread:$0]  %s87, 16, %s98, %s89
        %s101 = sadd.s32 %s52, 3
        %s102 = sld [smem:[#allocation5 + %s101]]
        %s103 = smul.addr %s102, 16
        %s104 = scalar_lea.hbm %s1, %s103
        %s105 = scalar_lea.vmem [#allocation2], 3
        %s106 = scalar_lea.sflag [#allocation3], 3
        // Predicated region
        $region25: #{tpu_custom_call.1} parent=11 // pred_check
          _
        $region26: #{tpu_custom_call.1} parent=11 // pred_check_branch
          %108 = sbr.rel target = $region28
        $region27: #{tpu_custom_call.1} parent=11 // pred_region
          %109 = sst [smem:[#allocation10]] [#allocation17]
          %110 = sst [smem:[#allocation11]] [#allocation16]
        $region28: #{tpu_custom_call.1} parent=11 // pred_fallthru
          _
        %112 = shalt.err (0)
        %s114 = sshll.u32 %s105, 4
        %s115 = int_to_ptr.vmem [resolvable:$true] %s114
        %117 = dma.hbm_to_vmem [thread:$0]  %s104, 16, %s115, %s106
        %s118 = sadd.s32 %s52, 4
        %s119 = sld [smem:[#allocation5 + %s118]]
        %s120 = smul.addr %s119, 16
        %s121 = scalar_lea.hbm %s1, %s120
        %s122 = scalar_lea.vmem [#allocation2], 4
        %s123 = scalar_lea.sflag [#allocation3], 4
        // Predicated region
        $region29: #{tpu_custom_call.1} parent=11 // pred_check
          _
        $region30: #{tpu_custom_call.1} parent=11 // pred_check_branch
          %125 = sbr.rel target = $region32
        $region31: #{tpu_custom_call.1} parent=11 // pred_region
          %126 = sst [smem:[#allocation10]] [#allocation19]
          %127 = sst [smem:[#allocation11]] [#allocation18]
        $region32: #{tpu_custom_call.1} parent=11 // pred_fallthru
          _
        %129 = shalt.err (0)
        %s131 = sshll.u32 %s122, 4
        %s132 = int_to_ptr.vmem [resolvable:$true] %s131
        %134 = dma.hbm_to_vmem [thread:$0]  %s121, 16, %s132, %s123
        %s135 = sadd.s32 %s52, 5
        %s136 = sld [smem:[#allocation5 + %s135]]
        %s137 = smul.addr %s136, 16
        %s138 = scalar_lea.hbm %s1, %s137
        %s139 = scalar_lea.vmem [#allocation2], 5
        %s140 = scalar_lea.sflag [#allocation3], 5
        // Predicated region
        $region33: #{tpu_custom_call.1} parent=11 // pred_check
          _
        $region34: #{tpu_custom_call.1} parent=11 // pred_check_branch
          %142 = sbr.rel target = $region36
        $region35: #{tpu_custom_call.1} parent=11 // pred_region
          %143 = sst [smem:[#allocation10]] [#allocation21]
          %144 = sst [smem:[#allocation11]] [#allocation20]
        $region36: #{tpu_custom_call.1} parent=11 // pred_fallthru
          _
        %146 = shalt.err (0)
        %s148 = sshll.u32 %s139, 4
        %s149 = int_to_ptr.vmem [resolvable:$true] %s148
        %151 = dma.hbm_to_vmem [thread:$0]  %s138, 16, %s149, %s140
        %s152 = sadd.s32 %s52, 6
        %s153 = sld [smem:[#allocation5 + %s152]]
        %s154 = smul.addr %s153, 16
        %s155 = scalar_lea.hbm %s1, %s154
        %s156 = scalar_lea.vmem [#allocation2], 6
        %s157 = scalar_lea.sflag [#allocation3], 6
        // Predicated region
        $region37: #{tpu_custom_call.1} parent=11 // pred_check
          _
        $region38: #{tpu_custom_call.1} parent=11 // pred_check_branch
          %159 = sbr.rel target = $region40
        $region39: #{tpu_custom_call.1} parent=11 // pred_region
          %160 = sst [smem:[#allocation10]] [#allocation23]
          %161 = sst [smem:[#allocation11]] [#allocation22]
        $region40: #{tpu_custom_call.1} parent=11 // pred_fallthru
          _
        %163 = shalt.err (0)
        %s165 = sshll.u32 %s156, 4
        %s166 = int_to_ptr.vmem [resolvable:$true] %s165
        %168 = dma.hbm_to_vmem [thread:$0]  %s155, 16, %s166, %s157
        %s169 = sadd.s32 %s52, 7
        %s170 = sld [smem:[#allocation5 + %s169]]
        %s171 = smul.addr %s170, 16
        %s172 = scalar_lea.hbm %s1, %s171
        %s173 = scalar_lea.vmem [#allocation2], 7
        %s174 = scalar_lea.sflag [#allocation3], 7
        // Predicated region
        $region41: #{tpu_custom_call.1} parent=11 // pred_check
          _
        $region42: #{tpu_custom_call.1} parent=11 // pred_check_branch
          %176 = sbr.rel target = $region44
        $region43: #{tpu_custom_call.1} parent=11 // pred_region
          %177 = sst [smem:[#allocation10]] [#allocation25]
          %178 = sst [smem:[#allocation11]] [#allocation24]
        $region44: #{tpu_custom_call.1} parent=11 // pred_fallthru
          _
        %180 = shalt.err (0)
        %s182 = sshll.u32 %s173, 4
        %s183 = int_to_ptr.vmem [resolvable:$true] %s182
        %185 = dma.hbm_to_vmem [thread:$0]  %s172, 16, %s183, %s174
        %s186 = smul.u32 1, 1
        %s187 = sshll.u32 %s186, 4
        %188 = dma.done [#allocation3], %s187
        %s189 = sshll.u32 %s186, 4
        %190 = dma.done %s72, %s189
        %s191 = sshll.u32 %s186, 4
        %192 = dma.done %s89, %s191
        %s193 = sshll.u32 %s186, 4
        %194 = dma.done %s106, %s193
        %s195 = sshll.u32 %s186, 4
        %196 = dma.done %s123, %s195
        %s197 = sshll.u32 %s186, 4
        %198 = dma.done %s140, %s197
        %s199 = sshll.u32 %s186, 4
        %200 = dma.done %s157, %s199
        %s201 = sshll.u32 %s186, 4
        %202 = dma.done %s174, %s201
        %v203 = vld [vmem:[#allocation2] sm:$0xff]
        %204 = vst [vmem:[%s51] sm:$0xff] %v203
        %s205 = sand.u32 %s24, 1
        %s206 = scalar_lea.sflag [#allocation7], %s205
        %s207 = sand.u32 %s24, 1
        %s208 = smul.addr %s207, 8
        %s209 = scalar_lea.vmem [#allocation6], %s208
        // Predicated region
        $region45: #{tpu_custom_call.1} parent=11 // pred_check
          %p210 = pneg %p30
        $region46: #{tpu_custom_call.1} parent=11 // pred_check_branch
          %212 = sbr.rel (%p210) target = $region48
        $region47: #{tpu_custom_call.1} parent=11 // pred_region
          %s214 = ssub.s32 128, 128
          %215 = vsyncadd %s206, %s214
          %s216 = smul.addr %s15, 128
          %s217 = scalar_lea.hbm %s2, %s216
          %s219 = sshll.u32 %s209, 4
          %s220 = int_to_ptr.vmem [resolvable:$true] %s219
          %222 = dma.vmem_to_hbm [thread:$0]  %s220, 128, %s217, %s206
        $region48: #{tpu_custom_call.1} parent=11 // pred_fallthru
          _
      $region12: #{tpu_custom_call.1} parent=5 // pred_fallthru
        _
      %p223 = scmp.le.s32.totalorder 1, %s15
      // Predicated region
      $region49: #{tpu_custom_call.1} parent=5 // pred_check
        %p224 = pneg %p223
      $region50: #{tpu_custom_call.1} parent=5 // pred_check_branch
        %226 = sbr.rel (%p224) target = $region52
      $region51: #{tpu_custom_call.1} parent=5 // pred_region
        %s227 = ssub.s32 %s15, 1
        // Predicated region
        $region53: #{tpu_custom_call.1} parent=51 // pred_check
          %p228 = pneg %p36
        $region54: #{tpu_custom_call.1} parent=51 // pred_check_branch
          %230 = sbr.rel (%p228) target = $region56
        $region55: #{tpu_custom_call.1} parent=51 // pred_region
          %s231 = sand.u32 %s27, 1
          %s232 = scalar_lea.sflag [#allocation7], %s231
          %s233 = sand.u32 %s27, 1
          %s234 = smul.addr %s233, 8
          %s235 = scalar_lea.vmem [#allocation6], %s234
          %236 = dma.done %s232, 128
        $region56: #{tpu_custom_call.1} parent=51 // pred_fallthru
          _
      $region52: #{tpu_custom_call.1} parent=5 // pred_fallthru
        _
    $region6: #{tpu_custom_call.1} parent=1 // loop_footer
      %s19 = sadd.s32 1, %s15
    $region7: #{tpu_custom_call.1} parent=1 // loop_footer_branch
      %14 = sbr.rel target = $region3
    $region8: #{tpu_custom_call.1} parent=1 // loop_exit
      _
    %237 = vsyncpa [#allocation7], 1
    %s238 = scalar_lea.sflag [#allocation7], 1
    %239 = vsyncpa %s238, 1
  %240 = vsyncmov [#allocation3]
  %s241 = vpop.sfrf %240
  %p242 = scmp.eq.s32.totalorder %s241, 0
  %p243 = pneg %p242
  %245 = shalt.err (%p243)
  %s246 = scalar_lea.sflag [#allocation3], 1
  %247 = vsyncmov %s246
  %s248 = vpop.sfrf %247
  %p249 = scmp.eq.s32.totalorder %s248, 0
  %p250 = pneg %p249
  %252 = shalt.err (%p250)
  %s253 = scalar_lea.sflag [#allocation3], 2
  %254 = vsyncmov %s253
  %s255 = vpop.sfrf %254
  %p256 = scmp.eq.s32.totalorder %s255, 0
  %p257 = pneg %p256
  %259 = shalt.err (%p257)
  %s260 = scalar_lea.sflag [#allocation3], 3
  %261 = vsyncmov %s260
  %s262 = vpop.sfrf %261
  %p263 = scmp.eq.s32.totalorder %s262, 0
  %p264 = pneg %p263
  %266 = shalt.err (%p264)
  %s267 = scalar_lea.sflag [#allocation3], 4
  %268 = vsyncmov %s267
  %s269 = vpop.sfrf %268
  %p270 = scmp.eq.s32.totalorder %s269, 0
  %p271 = pneg %p270
  %273 = shalt.err (%p271)
  %s274 = scalar_lea.sflag [#allocation3], 5
  %275 = vsyncmov %s274
  %s276 = vpop.sfrf %275
  %p277 = scmp.eq.s32.totalorder %s276, 0
  %p278 = pneg %p277
  %280 = shalt.err (%p278)
  %s281 = scalar_lea.sflag [#allocation3], 6
  %282 = vsyncmov %s281
  %s283 = vpop.sfrf %282
  %p284 = scmp.eq.s32.totalorder %s283, 0
  %p285 = pneg %p284
  %287 = shalt.err (%p285)
  %s288 = scalar_lea.sflag [#allocation3], 7
  %289 = vsyncmov %s288
  %s290 = vpop.sfrf %289
  %p291 = scmp.eq.s32.totalorder %s290, 0
  %p292 = pneg %p291
  %294 = shalt.err (%p292)
  %s295 = scalar_lea.sflag [#allocation3], 8
  %296 = vsyncmov %s295
  %s297 = vpop.sfrf %296
  %p298 = scmp.eq.s32.totalorder %s297, 0
  %p299 = pneg %p298
  %301 = shalt.err (%p299)
  %s302 = scalar_lea.sflag [#allocation3], 9
  %303 = vsyncmov %s302
  %s304 = vpop.sfrf %303
  %p305 = scmp.eq.s32.totalorder %s304, 0
  %p306 = pneg %p305
  %308 = shalt.err (%p306)
  %s309 = scalar_lea.sflag [#allocation3], 10
  %310 = vsyncmov %s309
  %s311 = vpop.sfrf %310
  %p312 = scmp.eq.s32.totalorder %s311, 0
  %p313 = pneg %p312
  %315 = shalt.err (%p313)
  %s316 = scalar_lea.sflag [#allocation3], 11
  %317 = vsyncmov %s316
  %s318 = vpop.sfrf %317
  %p319 = scmp.eq.s32.totalorder %s318, 0
  %p320 = pneg %p319
  %322 = shalt.err (%p320)
  %s323 = scalar_lea.sflag [#allocation3], 12
  %324 = vsyncmov %s323
  %s325 = vpop.sfrf %324
  %p326 = scmp.eq.s32.totalorder %s325, 0
  %p327 = pneg %p326
  %329 = shalt.err (%p327)
  %s330 = scalar_lea.sflag [#allocation3], 13
  %331 = vsyncmov %s330
  %s332 = vpop.sfrf %331
  %p333 = scmp.eq.s32.totalorder %s332, 0
  %p334 = pneg %p333
  %336 = shalt.err (%p334)
  %s337 = scalar_lea.sflag [#allocation3], 14
  %338 = vsyncmov %s337
  %s339 = vpop.sfrf %338
  %p340 = scmp.eq.s32.totalorder %s339, 0
  %p341 = pneg %p340
  %343 = shalt.err (%p341)
  %s344 = scalar_lea.sflag [#allocation3], 15
  %345 = vsyncmov %s344
  %s346 = vpop.sfrf %345
  %p347 = scmp.eq.s32.totalorder %s346, 0
  %p348 = pneg %p347
  %350 = shalt.err (%p348)

</llo_original>
